<compile_context>
chip_gen: v5e
topology: v5e:2x2
jax: 0.10.0
libtpu: 0.0.40
codegen_flags: <defaults>
</compile_context>

<pallas_src>
import functools

import jax
import jax.numpy as jnp
from jax.experimental import pallas as pl
from jax.experimental.pallas import tpu as pltpu
from jax.scipy.special import gammaln, digamma


def _round_up(x, m):
    return ((x + m - 1) // m) * m


def _device_supports_bf16_vpu():
    """v6e/v7x have bf16-native VPU/EUP; v5e and older do not."""
    try:
        kind = jax.devices()[0].device_kind.lower()
    except Exception:
        return False
    return not any(tag in kind for tag in ("v2", "v3", "v4", "v5"))


# ----------------------------- Pallas kernel --------------------------------

def actor_forward_kernel(f_lo, f_hi, cr_lo, cr_hi, emb, act_dtype,
                         x_ref,
                         wf_ref, bf_ref,
                         w2_ref, b2_ref,
                         w3_ref, b3_ref,
                         wh1_ref, bh1_ref,
                         wh2_ref, bh2_ref,
                         out_ref):
    x = x_ref[...]

    def linear(h, w_ref, b_ref, out_dt):
        # MXU operands in the weight dtype (bf16 fast path), f32 accumulation,
        # bias-add in out_dt (bf16 on bf16-native VPUs, else f32).
        acc = jnp.dot(h.astype(w_ref.dtype), w_ref[...],
                      preferred_element_type=jnp.float32)
        return acc.astype(out_dt) + b_ref[...]

    # Folded EmbeddingNet+encoder-layer1, then encoder layers 2/3 (ReLU each).
    # Dropout(p=0.001) == identity in inference.
    h = jnp.maximum(linear(x, wf_ref, bf_ref, act_dtype), 0)
    h = jnp.maximum(linear(h, w2_ref, b2_ref, act_dtype), 0)
    logits = jnp.maximum(linear(h, w3_ref, b3_ref, act_dtype), 0)

    # Fused heads: one (emb, 64) GEMM + ReLU, one block-diagonal (64, 8) GEMM.
    z = jnp.maximum(linear(logits, wh1_ref, bh1_ref, act_dtype), 0)   # (tn, 64)
    raw = linear(z, wh2_ref, bh2_ref, jnp.float32)                    # (tn, 8) f32

    # --- head post-processing on the intact (tn, 8) block via lane masks ---
    lane = jax.lax.broadcasted_iota(jnp.int32, raw.shape, 1)          # (tn, 8)

    # sigmoid-scale lanes 0 (F) and 1 (Cr)
    scale = jnp.where(lane == 0, f_hi - f_lo,
                      jnp.where(lane == 1, cr_hi - cr_lo, 0.0))
    low = jnp.where(lane == 0, f_lo, jnp.where(lane == 1, cr_lo, 0.0))
    sig = jax.nn.sigmoid(raw) * scale + low

    mask_mu = (lane >= 2) & (lane <= 5)
    mask_co = lane >= 6

    def masked_softmax(v, m):
        zz = jnp.where(m, v, -jnp.inf)
        zmax = jnp.max(zz, axis=-1, keepdims=True)
        e = jnp.exp(zz - zmax)                     # masked lanes -> exp(-inf) = 0
        s = jnp.sum(e, axis=-1, keepdims=True)
        return e * pl.reciprocal(s, approx=True)

    mu_vals = masked_softmax(raw, mask_mu)
    co_vals = masked_softmax(raw, mask_co)

    processed = jnp.where(lane < 2, sig,
                          jnp.where(mask_mu, mu_vals, co_vals))       # (tn, 8)

    # Single lane-dense packed output row: [logits | aF aCr mu(4) co(2) | pad]
    tn = logits.shape[0]
    out_dt = out_ref.dtype
    pad_w = out_ref.shape[1] - (emb + 8)
    parts = [logits.astype(out_dt), processed.astype(out_dt)]
    if pad_w:
        parts.append(jnp.zeros((tn, pad_w), out_dt))
    out_ref[...] = jnp.concatenate(parts, axis=-1)


# --------------------- one-time parameter preparation ------------------------

def prepare_actor_params(params, *, use_bf16=True, bf16_activations=None):
    """Fold/pack/cast the Actor parameters once (hoisted out of the forward path)."""
    if bf16_activations is None:
        bf16_activations = use_bf16 and _device_supports_bf16_vpu()
    wdt = jnp.bfloat16 if use_bf16 else jnp.float32
    adt = jnp.bfloat16 if bf16_activations else jnp.float32

    emb = params["we"].shape[1]

    # Fold EmbeddingNet linear into encoder layer 1 (no nonlinearity in between).
    w_fold = params["we"] @ params["w1"]                       # (node_dim, hid)
    b_fold = params["be"] @ params["w1"] + params["b1"]        # (1, hid)

    # Pack the four head networks into two GEMMs.
    h_keys1 = ["wf1", "wc1", "wm1", "wo1"]
    b_keys1 = ["bf1", "bc1", "bm1", "bo1"]
    h_keys2 = ["wf2", "wc2", "wm2", "wo2"]
    b_keys2 = ["bf2", "bc2", "bm2", "bo2"]
    h_sizes = [params[k].shape[1] for k in h_keys1]            # [16,16,16,16]
    o_sizes = [params[k].shape[1] for k in h_keys2]            # [1,1,4,2]
    Hh, Ho = sum(h_sizes), sum(o_sizes)

    wh1 = jnp.concatenate([params[k] for k in h_keys1], axis=1)   # (emb, 64)
    bh1 = jnp.concatenate([params[k] for k in b_keys1], axis=1)   # (1, 64)
    wh2 = jnp.zeros((Hh, Ho), jnp.float32)                        # block-diagonal
    r = c = 0
    for k, hs, os_ in zip(h_keys2, h_sizes, o_sizes):
        wh2 = wh2.at[r:r + hs, c:c + os_].set(params[k])
        r += hs
        c += os_
    bh2 = jnp.concatenate([params[k] for k in b_keys2], axis=1)   # (1, 8)

    return {
        "wf": w_fold.astype(wdt), "bf": b_fold.astype(adt),
        "w2": params["w2"].astype(wdt), "b2": params["b2"].astype(adt),
        "w3": params["w3"].astype(wdt), "b3": params["b3"].astype(adt),
        "wh1": wh1.astype(wdt), "bh1": bh1.astype(adt),
        "wh2": wh2.astype(wdt), "bh2": bh2.astype(jnp.float32),
        "emb": emb, "act_dtype": adt,
    }


# ------------------------------- pallas wrapper -------------------------------

def actor_heads_pallas(x_flat, prepared, F_range, Cr_range,
                       *, tile_n=4096, out_dtype=jnp.float32):
    """x_flat: [N, node_dim] float32 (passed as-is; cast happens in-kernel).

    Returns (logits, alpha_F, alpha_Cr, mu_op, co_op) in float32.
    """
    N, node_dim = x_flat.shape
    emb = prepared["emb"]
    out_w = _round_up(emb + 8, 128)        # lane-dense packed output width

    # Row tile: big (per-tile VMEM is small), 16-aligned for bf16 sublane
    # packing, and capped at ~N/2 so the grid has >= 2 steps when N is large
    # enough (lets "parallel" shard rows across v7x's 2 TensorCores).
    tn = min(tile_n, _round_up(max(N // 2, 16), 16))
    n_pad = _round_up(N, tn)
    x_in = x_flat
    if n_pad != N:
        x_in = jnp.pad(x_in, ((0, n_pad - N), (0, 0)))
    grid = (n_pad // tn,)

    weight_keys = ("wf", "bf", "w2", "b2", "w3", "b3", "wh1", "bh1", "wh2", "bh2")
    weight_args = [prepared[k] for k in weight_keys]

    x_spec = pl.BlockSpec((tn, node_dim), lambda i: (i, 0))
    w_specs = [pl.BlockSpec(a.shape, lambda i: (0, 0)) for a in weight_args]
    out_spec = pl.BlockSpec((tn, out_w), lambda i: (i, 0))

    kernel = functools.partial(
        actor_forward_kernel,
        float(F_range[0]), float(F_range[1]),
        float(Cr_range[0]), float(Cr_range[1]),
        emb, prepared["act_dtype"],
    )

    packed = pl.pallas_call(
        kernel,
        grid=grid,
        out_shape=jax.ShapeDtypeStruct((n_pad, out_w), out_dtype),
        in_specs=[x_spec] + w_specs,
        out_specs=out_spec,
        compiler_params=pltpu.CompilerParams(
            dimension_semantics=("parallel",)),
    )(x_in, *weight_args)

    packed = packed[:N].astype(jnp.float32)
    logits = packed[:, :emb]
    alpha_F = packed[:, emb:emb + 1]
    alpha_Cr = packed[:, emb + 1:emb + 2]
    mu_op = packed[:, emb + 2:emb + 6]
    co_op = packed[:, emb + 6:emb + 8]
    return logits, alpha_F, alpha_Cr, mu_op, co_op


# ----------------------------- Plain-JAX glue --------------------------------

def gamma_log_prob(x, alpha, beta):
    return alpha * jnp.log(beta) + (alpha - 1.0) * jnp.log(x) - beta * x - gammaln(alpha)


def gamma_entropy(alpha, beta):
    return alpha - jnp.log(beta) + gammaln(alpha) + (1.0 - alpha) * digamma(alpha)


def categorical_log_prob(probs, idx):
    # Matches torch.Categorical.log_prob semantics (-inf if the prob underflows to 0).
    return jnp.log(jnp.take_along_axis(probs, idx[..., None], axis=-1))[..., 0]


def categorical_entropy(probs):
    return -jnp.sum(probs * jnp.log(probs), axis=-1)


def actor_forward(x_in, prepared, F_range, Cr_range, beta_F, beta_Cr,
                  fixed_action, require_entropy=True, to_critic=True):
    """x_in: [bs, ps, node_dim]. fixed_action: [4, bs, ps] (F, Cr, op-index, co-index)."""
    bs, ps, node_dim = x_in.shape
    x_flat = x_in.reshape(bs * ps, node_dim).astype(jnp.float32)

    logits, alpha_F, alpha_Cr, mu_op, co_op = actor_heads_pallas(
        x_flat, prepared, F_range, Cr_range)

    emb = logits.shape[-1]
    logits = logits.reshape(bs, ps, emb)
    alpha_F = alpha_F.reshape(bs, ps)
    alpha_Cr = alpha_Cr.reshape(bs, ps)
    mu_op = mu_op.reshape(bs, ps, 4)
    co_op = co_op.reshape(bs, ps, 2)

    # fixed_action path (deterministic); Gamma/Categorical sampling is stochastic.
    # TODO(synk): the original's sample/greedy branches (policy.sample()) have no
    # deterministic Pallas equivalent; only the fixed_action path is implemented.
    action = jnp.asarray(fixed_action, dtype=jnp.float32)
    a_F, a_Cr = action[0], action[1]
    a_mu = action[2].astype(jnp.int32)
    a_co = action[3].astype(jnp.int32)

    ll = jnp.concatenate([
        gamma_log_prob(a_F, alpha_F, beta_F),
        gamma_log_prob(a_Cr, alpha_Cr, beta_Cr),
        categorical_log_prob(mu_op, a_mu),
        categorical_log_prob(co_op, a_co),
    ], axis=-1)                                   # [bs, 4*ps]
    # TODO(synk): original torch.cat mixes [bs,ps,1] and [bs,ps] tensors; we use the
    # squeezed [bs,ps] convention consistently (harmless: immediately summed over dim 1).

    out_logits = logits if to_critic else None

    if require_entropy:
        entropy = jnp.concatenate([
            gamma_entropy(alpha_F, beta_F),
            gamma_entropy(alpha_Cr, beta_Cr),
            categorical_entropy(mu_op),
            categorical_entropy(co_op),
        ], axis=-1)
        return action, ll.sum(1), out_logits, entropy
    return action, ll.sum(1), out_logits


# ----------------------------- Parameter init --------------------------------

def _init_linear(key, fan_in, fan_out):
    kw, kb = jax.random.split(key)
    bound = 1.0 / jnp.sqrt(fan_in)
    w = jax.random.uniform(kw, (fan_in, fan_out), jnp.float32, -bound, bound)
    b = jax.random.uniform(kb, (1, fan_out), jnp.float32, -bound, bound)
    return w, b


def init_actor_params(key, node_dim, embedding_dim, hidden_dim):
    keys = jax.random.split(key, 12)
    p = {}
    p["we"], p["be"] = _init_linear(keys[0], node_dim, embedding_dim)        # EmbeddingNet
    p["w1"], p["b1"] = _init_linear(keys[1], embedding_dim, hidden_dim)      # encoder
    p["w2"], p["b2"] = _init_linear(keys[2], hidden_dim, hidden_dim)
    p["w3"], p["b3"] = _init_linear(keys[3], hidden_dim, embedding_dim)
    p["wf1"], p["bf1"] = _init_linear(keys[4], embedding_dim, 16)            # mu_net_F
    p["wf2"], p["bf2"] = _init_linear(keys[5], 16, 1)
    p["wc1"], p["bc1"] = _init_linear(keys[6], embedding_dim, 16)            # mu_net_Cr
    p["wc2"], p["bc2"] = _init_linear(keys[7], 16, 1)
    p["wm1"], p["bm1"] = _init_linear(keys[8], embedding_dim, 16)            # mu_net_op
    p["wm2"], p["bm2"] = _init_linear(keys[9], 16, 4)
    p["wo1"], p["bo1"] = _init_linear(keys[10], embedding_dim, 16)           # co_net_op
    p["wo2"], p["bo2"] = _init_linear(keys[11], 16, 2)
    return p


# ----------------------------------- main ------------------------------------

if __name__ == "__main__":
    # small shapes consistent with Actor.forward: x_in = [bs, ps, node_dim]
    bs, ps = 2, 8
    node_dim = 4
    embedding_dim = 32
    hidden_dim = 32
    F_range = (0.1, 3.0)
    Cr_range = (0.1, 3.0)
    beta_F = 7.0
    beta_Cr = 7.0

    key = jax.random.PRNGKey(0)
    k_x, k_p, k_f, k_cr, k_mu, k_co = jax.random.split(key, 6)

    x_in = jax.random.normal(k_x, (bs, ps, node_dim), jnp.float32)
    params = init_actor_params(k_p, node_dim, embedding_dim, hidden_dim)

    # One-time param prep (folding, head packing, dtype casts) -- hoisted out of
    # the per-forward path.
    prepared = prepare_actor_params(params, use_bf16=True)

    fixed_action = jnp.stack([
        jax.random.uniform(k_f, (bs, ps), jnp.float32, 0.2, 2.0),            # F
        jax.random.uniform(k_cr, (bs, ps), jnp.float32, 0.2, 2.0),           # Cr
        jax.random.randint(k_mu, (bs, ps), 0, 4).astype(jnp.float32),        # op index
        jax.random.randint(k_co, (bs, ps), 0, 2).astype(jnp.float32),        # co index
    ])

    action, ll_sum, logits, entropy = actor_forward(
        x_in, prepared, F_range, Cr_range, beta_F, beta_Cr,
        fixed_action=fixed_action, require_entropy=True, to_critic=True)

    jax.block_until_ready((action, ll_sum, logits, entropy))

    assert action.shape == (4, bs, ps)
    assert ll_sum.shape == (bs,)
    assert logits.shape == (bs, ps, embedding_dim)
    assert entropy.shape == (bs, 4 * ps)
    assert bool(jnp.all(jnp.isfinite(ll_sum)))
    assert bool(jnp.all(jnp.isfinite(entropy)))

    print("KERNEL_OK")
</pallas_src>

<mosaic_0001>
module attributes {stable_mosaic.version = 11 : i64} {
  func.func @actor_forward_kernel(%arg0: i32, %arg1: memref<16x4xf32, #tpu.memory_space<vmem>>, %arg2: memref<4x32xbf16, #tpu.memory_space<vmem>>, %arg3: memref<1x32xbf16, #tpu.memory_space<vmem>>, %arg4: memref<32x32xbf16, #tpu.memory_space<vmem>>, %arg5: memref<1x32xbf16, #tpu.memory_space<vmem>>, %arg6: memref<32x32xbf16, #tpu.memory_space<vmem>>, %arg7: memref<1x32xbf16, #tpu.memory_space<vmem>>, %arg8: memref<32x64xbf16, #tpu.memory_space<vmem>>, %arg9: memref<1x64xbf16, #tpu.memory_space<vmem>>, %arg10: memref<64x8xbf16, #tpu.memory_space<vmem>>, %arg11: memref<1x8xf32, #tpu.memory_space<vmem>>, %arg12: memref<16x128xf32, #tpu.memory_space<vmem>>) attributes {dimension_semantics = [#tpu.dimension_semantics<parallel>], iteration_bounds = array<i64: 1>, scalar_prefetch = 0 : i64, scratch_operands = 0 : i64, tpu.core_type = #tpu.core_type<tc>, window_params = [{transform_indices = @transform_0, window_bounds = array<i64: 16, 4>}, {pipeline_mode = #tpu.pipeline_mode<synchronous>, transform_indices = @transform_1, window_bounds = array<i64: 4, 32>}, {pipeline_mode = #tpu.pipeline_mode<synchronous>, transform_indices = @transform_2, window_bounds = array<i64: 1, 32>}, {pipeline_mode = #tpu.pipeline_mode<synchronous>, transform_indices = @transform_3, window_bounds = array<i64: 32, 32>}, {pipeline_mode = #tpu.pipeline_mode<synchronous>, transform_indices = @transform_4, window_bounds = array<i64: 1, 32>}, {pipeline_mode = #tpu.pipeline_mode<synchronous>, transform_indices = @transform_5, window_bounds = array<i64: 32, 32>}, {pipeline_mode = #tpu.pipeline_mode<synchronous>, transform_indices = @transform_6, window_bounds = array<i64: 1, 32>}, {pipeline_mode = #tpu.pipeline_mode<synchronous>, transform_indices = @transform_7, window_bounds = array<i64: 32, 64>}, {pipeline_mode = #tpu.pipeline_mode<synchronous>, transform_indices = @transform_8, window_bounds = array<i64: 1, 64>}, {pipeline_mode = #tpu.pipeline_mode<synchronous>, transform_indices = @transform_9, window_bounds = array<i64: 64, 8>}, {pipeline_mode = #tpu.pipeline_mode<synchronous>, transform_indices = @transform_10, window_bounds = array<i64: 1, 8>}, {transform_indices = @transform_11, window_bounds = array<i64: 16, 128>}]} {
    %c0 = arith.constant 0 : index
    %c0_0 = arith.constant 0 : index
    %0 = vector.load %arg1[%c0, %c0_0] : memref<16x4xf32, #tpu.memory_space<vmem>>, vector<16x4xf32>
    %1 = arith.truncf %0 : vector<16x4xf32> to vector<16x4xbf16>
    %c0_1 = arith.constant 0 : index
    %c0_2 = arith.constant 0 : index
    %2 = vector.load %arg2[%c0_1, %c0_2] : memref<4x32xbf16, #tpu.memory_space<vmem>>, vector<4x32xbf16>
    %cst = arith.constant dense<0.000000e+00> : vector<16x32xf32>
    %3 = tpu.matmul %1, %2, %cst {dimension_numbers = #tpu.dot_dimension_numbers<[1], [0], [0], [1], [0, 0, 1, 1], [], []>} : vector<16x4xbf16>, vector<4x32xbf16>, vector<16x32xf32> -> vector<16x32xf32>
    %4 = arith.truncf %3 : vector<16x32xf32> to vector<16x32xbf16>
    %c0_3 = arith.constant 0 : index
    %c0_4 = arith.constant 0 : index
    %5 = vector.load %arg3[%c0_3, %c0_4] : memref<1x32xbf16, #tpu.memory_space<vmem>>, vector<1x32xbf16>
    %6 = vector.broadcast %5 : vector<1x32xbf16> to vector<16x32xbf16>
    %7 = arith.addf %4, %6 : vector<16x32xbf16>
    %cst_5 = arith.constant 0.000000e+00 : bf16
    %8 = vector.broadcast %cst_5 : bf16 to vector<16x32xbf16>
    %9 = arith.maximumf %7, %8 : vector<16x32xbf16>
    %c0_6 = arith.constant 0 : index
    %c0_7 = arith.constant 0 : index
    %10 = vector.load %arg4[%c0_6, %c0_7] : memref<32x32xbf16, #tpu.memory_space<vmem>>, vector<32x32xbf16>
    %cst_8 = arith.constant dense<0.000000e+00> : vector<16x32xf32>
    %11 = tpu.matmul %9, %10, %cst_8 {dimension_numbers = #tpu.dot_dimension_numbers<[1], [0], [0], [1], [0, 0, 1, 1], [], []>} : vector<16x32xbf16>, vector<32x32xbf16>, vector<16x32xf32> -> vector<16x32xf32>
    %12 = arith.truncf %11 : vector<16x32xf32> to vector<16x32xbf16>
    %c0_9 = arith.constant 0 : index
    %c0_10 = arith.constant 0 : index
    %13 = vector.load %arg5[%c0_9, %c0_10] : memref<1x32xbf16, #tpu.memory_space<vmem>>, vector<1x32xbf16>
    %14 = vector.broadcast %13 : vector<1x32xbf16> to vector<16x32xbf16>
    %15 = arith.addf %12, %14 : vector<16x32xbf16>
    %cst_11 = arith.constant 0.000000e+00 : bf16
    %16 = vector.broadcast %cst_11 : bf16 to vector<16x32xbf16>
    %17 = arith.maximumf %15, %16 : vector<16x32xbf16>
    %c0_12 = arith.constant 0 : index
    %c0_13 = arith.constant 0 : index
    %18 = vector.load %arg6[%c0_12, %c0_13] : memref<32x32xbf16, #tpu.memory_space<vmem>>, vector<32x32xbf16>
    %cst_14 = arith.constant dense<0.000000e+00> : vector<16x32xf32>
    %19 = tpu.matmul %17, %18, %cst_14 {dimension_numbers = #tpu.dot_dimension_numbers<[1], [0], [0], [1], [0, 0, 1, 1], [], []>} : vector<16x32xbf16>, vector<32x32xbf16>, vector<16x32xf32> -> vector<16x32xf32>
    %20 = arith.truncf %19 : vector<16x32xf32> to vector<16x32xbf16>
    %c0_15 = arith.constant 0 : index
    %c0_16 = arith.constant 0 : index
    %21 = vector.load %arg7[%c0_15, %c0_16] : memref<1x32xbf16, #tpu.memory_space<vmem>>, vector<1x32xbf16>
    %22 = vector.broadcast %21 : vector<1x32xbf16> to vector<16x32xbf16>
    %23 = arith.addf %20, %22 : vector<16x32xbf16>
    %cst_17 = arith.constant 0.000000e+00 : bf16
    %24 = vector.broadcast %cst_17 : bf16 to vector<16x32xbf16>
    %25 = arith.maximumf %23, %24 : vector<16x32xbf16>
    %c0_18 = arith.constant 0 : index
    %c0_19 = arith.constant 0 : index
    %26 = vector.load %arg8[%c0_18, %c0_19] : memref<32x64xbf16, #tpu.memory_space<vmem>>, vector<32x64xbf16>
    %cst_20 = arith.constant dense<0.000000e+00> : vector<16x64xf32>
    %27 = tpu.matmul %25, %26, %cst_20 {dimension_numbers = #tpu.dot_dimension_numbers<[1], [0], [0], [1], [0, 0, 1, 1], [], []>} : vector<16x32xbf16>, vector<32x64xbf16>, vector<16x64xf32> -> vector<16x64xf32>
    %28 = arith.truncf %27 : vector<16x64xf32> to vector<16x64xbf16>
    %c0_21 = arith.constant 0 : index
    %c0_22 = arith.constant 0 : index
    %29 = vector.load %arg9[%c0_21, %c0_22] : memref<1x64xbf16, #tpu.memory_space<vmem>>, vector<1x64xbf16>
    %30 = vector.broadcast %29 : vector<1x64xbf16> to vector<16x64xbf16>
    %31 = arith.addf %28, %30 : vector<16x64xbf16>
    %cst_23 = arith.constant 0.000000e+00 : bf16
    %32 = vector.broadcast %cst_23 : bf16 to vector<16x64xbf16>
    %33 = arith.maximumf %31, %32 : vector<16x64xbf16>
    %c0_24 = arith.constant 0 : index
    %c0_25 = arith.constant 0 : index
    %34 = vector.load %arg10[%c0_24, %c0_25] : memref<64x8xbf16, #tpu.memory_space<vmem>>, vector<64x8xbf16>
    %cst_26 = arith.constant dense<0.000000e+00> : vector<16x8xf32>
    %35 = tpu.matmul %33, %34, %cst_26 {dimension_numbers = #tpu.dot_dimension_numbers<[1], [0], [0], [1], [0, 0, 1, 1], [], []>} : vector<16x64xbf16>, vector<64x8xbf16>, vector<16x8xf32> -> vector<16x8xf32>
    %c0_27 = arith.constant 0 : index
    %c0_28 = arith.constant 0 : index
    %36 = vector.load %arg11[%c0_27, %c0_28] : memref<1x8xf32, #tpu.memory_space<vmem>>, vector<1x8xf32>
    %37 = vector.broadcast %36 : vector<1x8xf32> to vector<16x8xf32>
    %38 = arith.addf %35, %37 : vector<16x8xf32>
    %39 = tpu.iota {dimensions = array<i32: 1>} : vector<16x8xi32>
    %c0_i32 = arith.constant 0 : i32
    %40 = vector.broadcast %c0_i32 : i32 to vector<16x8xi32>
    %41 = arith.cmpi eq, %39, %40 : vector<16x8xi32>
    %c1_i32 = arith.constant 1 : i32
    %42 = vector.broadcast %c1_i32 : i32 to vector<16x8xi32>
    %43 = arith.cmpi eq, %39, %42 : vector<16x8xi32>
    %cst_29 = arith.constant 2.900000e+00 : f32
    %cst_30 = arith.constant 0.000000e+00 : f32
    %44 = vector.broadcast %cst_29 : f32 to vector<16x8xf32>
    %45 = vector.broadcast %cst_30 : f32 to vector<16x8xf32>
    %46 = arith.select %43, %44, %45 : vector<16x8xi1>, vector<16x8xf32>
    %cst_31 = arith.constant 2.900000e+00 : f32
    %47 = vector.broadcast %cst_31 : f32 to vector<16x8xf32>
    %48 = arith.select %41, %47, %46 : vector<16x8xi1>, vector<16x8xf32>
    %c0_i32_32 = arith.constant 0 : i32
    %49 = vector.broadcast %c0_i32_32 : i32 to vector<16x8xi32>
    %50 = arith.cmpi eq, %39, %49 : vector<16x8xi32>
    %c1_i32_33 = arith.constant 1 : i32
    %51 = vector.broadcast %c1_i32_33 : i32 to vector<16x8xi32>
    %52 = arith.cmpi eq, %39, %51 : vector<16x8xi32>
    %cst_34 = arith.constant 1.000000e-01 : f32
    %cst_35 = arith.constant 0.000000e+00 : f32
    %53 = vector.broadcast %cst_34 : f32 to vector<16x8xf32>
    %54 = vector.broadcast %cst_35 : f32 to vector<16x8xf32>
    %55 = arith.select %52, %53, %54 : vector<16x8xi1>, vector<16x8xf32>
    %cst_36 = arith.constant 1.000000e-01 : f32
    %56 = vector.broadcast %cst_36 : f32 to vector<16x8xf32>
    %57 = arith.select %50, %56, %55 : vector<16x8xi1>, vector<16x8xf32>
    %58 = arith.negf %38 : vector<16x8xf32>
    %59 = math.exp %58 : vector<16x8xf32>
    %cst_37 = arith.constant 1.000000e+00 : f32
    %60 = vector.broadcast %cst_37 : f32 to vector<16x8xf32>
    %61 = arith.addf %60, %59 : vector<16x8xf32>
    %62 = arith.divf %60, %61 : vector<16x8xf32>
    %63 = arith.mulf %62, %48 : vector<16x8xf32>
    %64 = arith.addf %63, %57 : vector<16x8xf32>
    %c2_i32 = arith.constant 2 : i32
    %65 = vector.broadcast %c2_i32 : i32 to vector<16x8xi32>
    %66 = arith.cmpi sge, %39, %65 : vector<16x8xi32>
    %c5_i32 = arith.constant 5 : i32
    %67 = vector.broadcast %c5_i32 : i32 to vector<16x8xi32>
    %68 = arith.cmpi sle, %39, %67 : vector<16x8xi32>
    %69 = arith.andi %66, %68 : vector<16x8xi1>
    %c6_i32 = arith.constant 6 : i32
    %70 = vector.broadcast %c6_i32 : i32 to vector<16x8xi32>
    %71 = arith.cmpi sge, %39, %70 : vector<16x8xi32>
    %cst_38 = arith.constant 0xFF800000 : f32
    %72 = vector.broadcast %cst_38 : f32 to vector<16x8xf32>
    %73 = arith.select %69, %38, %72 : vector<16x8xi1>, vector<16x8xf32>
    %cst_39 = arith.constant dense<0xFF800000> : vector<16xf32>
    %74 = vector.multi_reduction <maximumf>, %73, %cst_39 [1] : vector<16x8xf32> to vector<16xf32>
    %75 = vector.shape_cast %74 : vector<16xf32> to vector<16x1xf32>
    %76 = vector.broadcast %75 : vector<16x1xf32> to vector<16x8xf32>
    %77 = arith.subf %73, %76 : vector<16x8xf32>
    %78 = math.exp %77 : vector<16x8xf32>
    %cst_40 = arith.constant dense<0.000000e+00> : vector<16xf32>
    %79 = vector.multi_reduction <add>, %78, %cst_40 [1] : vector<16x8xf32> to vector<16xf32>
    %80 = vector.shape_cast %79 : vector<16xf32> to vector<16x1xf32>
    %81 = tpu.reciprocal %80 {approx = true} : vector<16x1xf32> -> vector<16x1xf32>
    %82 = vector.broadcast %81 : vector<16x1xf32> to vector<16x8xf32>
    %83 = arith.mulf %78, %82 : vector<16x8xf32>
    %cst_41 = arith.constant 0xFF800000 : f32
    %84 = vector.broadcast %cst_41 : f32 to vector<16x8xf32>
    %85 = arith.select %71, %38, %84 : vector<16x8xi1>, vector<16x8xf32>
    %cst_42 = arith.constant dense<0xFF800000> : vector<16xf32>
    %86 = vector.multi_reduction <maximumf>, %85, %cst_42 [1] : vector<16x8xf32> to vector<16xf32>
    %87 = vector.shape_cast %86 : vector<16xf32> to vector<16x1xf32>
    %88 = vector.broadcast %87 : vector<16x1xf32> to vector<16x8xf32>
    %89 = arith.subf %85, %88 : vector<16x8xf32>
    %90 = math.exp %89 : vector<16x8xf32>
    %cst_43 = arith.constant dense<0.000000e+00> : vector<16xf32>
    %91 = vector.multi_reduction <add>, %90, %cst_43 [1] : vector<16x8xf32> to vector<16xf32>
    %92 = vector.shape_cast %91 : vector<16xf32> to vector<16x1xf32>
    %93 = tpu.reciprocal %92 {approx = true} : vector<16x1xf32> -> vector<16x1xf32>
    %94 = vector.broadcast %93 : vector<16x1xf32> to vector<16x8xf32>
    %95 = arith.mulf %90, %94 : vector<16x8xf32>
    %c2_i32_44 = arith.constant 2 : i32
    %96 = vector.broadcast %c2_i32_44 : i32 to vector<16x8xi32>
    %97 = arith.cmpi slt, %39, %96 : vector<16x8xi32>
    %98 = arith.select %69, %83, %95 : vector<16x8xi1>, vector<16x8xf32>
    %99 = arith.select %97, %64, %98 : vector<16x8xi1>, vector<16x8xf32>
    %100 = arith.extf %25 : vector<16x32xbf16> to vector<16x32xf32>
    %cst_45 = arith.constant 0.000000e+00 : f32
    %101 = vector.broadcast %cst_45 : f32 to vector<16x88xf32>
    %102 = tpu.concatenate %100, %99, %101 in 1 : vector<16x32xf32>, vector<16x8xf32>, vector<16x88xf32> -> vector<16x128xf32>
    %c0_46 = arith.constant 0 : index
    %c0_47 = arith.constant 0 : index
    %103 = vector.load %arg12[%c0_46, %c0_47] : memref<16x128xf32, #tpu.memory_space<vmem>>, vector<16x128xf32>
    tpu.vector_store %arg12[%c0_46, %c0_47], %102 {strides = array<i32>} : memref<16x128xf32, #tpu.memory_space<vmem>>, vector<16x128xf32>,
    return
  }
  func.func @transform_0(%arg0: i32) -> (i32, i32) {
    %c0_i32 = arith.constant 0 : i32
    %c0_i32_0 = arith.constant 0 : i32
    return %arg0, %c0_i32 : i32, i32
  }
  func.func @transform_1(%arg0: i32) -> (i32, i32) {
    %c0_i32 = arith.constant 0 : i32
    %c0_i32_0 = arith.constant 0 : i32
    %c0_i32_1 = arith.constant 0 : i32
    return %c0_i32, %c0_i32_0 : i32, i32
  }
  func.func @transform_2(%arg0: i32) -> (i32, i32) {
    %c0_i32 = arith.constant 0 : i32
    %c0_i32_0 = arith.constant 0 : i32
    %c0_i32_1 = arith.constant 0 : i32
    return %c0_i32, %c0_i32_0 : i32, i32
  }
  func.func @transform_3(%arg0: i32) -> (i32, i32) {
    %c0_i32 = arith.constant 0 : i32
    %c0_i32_0 = arith.constant 0 : i32
    %c0_i32_1 = arith.constant 0 : i32
    return %c0_i32, %c0_i32_0 : i32, i32
  }
  func.func @transform_4(%arg0: i32) -> (i32, i32) {
    %c0_i32 = arith.constant 0 : i32
    %c0_i32_0 = arith.constant 0 : i32
    %c0_i32_1 = arith.constant 0 : i32
    return %c0_i32, %c0_i32_0 : i32, i32
  }
  func.func @transform_5(%arg0: i32) -> (i32, i32) {
    %c0_i32 = arith.constant 0 : i32
    %c0_i32_0 = arith.constant 0 : i32
    %c0_i32_1 = arith.constant 0 : i32
    return %c0_i32, %c0_i32_0 : i32, i32
  }
  func.func @transform_6(%arg0: i32) -> (i32, i32) {
    %c0_i32 = arith.constant 0 : i32
    %c0_i32_0 = arith.constant 0 : i32
    %c0_i32_1 = arith.constant 0 : i32
    return %c0_i32, %c0_i32_0 : i32, i32
  }
  func.func @transform_7(%arg0: i32) -> (i32, i32) {
    %c0_i32 = arith.constant 0 : i32
    %c0_i32_0 = arith.constant 0 : i32
    %c0_i32_1 = arith.constant 0 : i32
    return %c0_i32, %c0_i32_0 : i32, i32
  }
  func.func @transform_8(%arg0: i32) -> (i32, i32) {
    %c0_i32 = arith.constant 0 : i32
    %c0_i32_0 = arith.constant 0 : i32
    %c0_i32_1 = arith.constant 0 : i32
    return %c0_i32, %c0_i32_0 : i32, i32
  }
  func.func @transform_9(%arg0: i32) -> (i32, i32) {
    %c0_i32 = arith.constant 0 : i32
    %c0_i32_0 = arith.constant 0 : i32
    %c0_i32_1 = arith.constant 0 : i32
    return %c0_i32, %c0_i32_0 : i32, i32
  }
  func.func @transform_10(%arg0: i32) -> (i32, i32) {
    %c0_i32 = arith.constant 0 : i32
    %c0_i32_0 = arith.constant 0 : i32
    %c0_i32_1 = arith.constant 0 : i32
    return %c0_i32, %c0_i32_0 : i32, i32
  }
  func.func @transform_11(%arg0: i32) -> (i32, i32) {
    %c0_i32 = arith.constant 0 : i32
    %c0_i32_0 = arith.constant 0 : i32
    return %arg0, %c0_i32 : i32, i32
  }
}

</mosaic_0001>

<llo_original>
// kernel: tpu_custom_call.1
$region0: #{tpu_custom_call.1}
  #allocation0 [shape = 'u32[]', space=smem, size = 0x4, offset = 0x4, fixed_abs, tag = 'smem constant byte address 0x4 - core index']
  #allocation1 [shape = 'u32[72,128]{1,0:T(1,128)}', space=vmem, size = 0x9000, scoped, tag = 'internal scratch']
  %s0 = inlined_call_operand.vmem [shape: f32[16,4], index: 0, kind: input, shape index: {}]
  %s1 = inlined_call_operand.vmem [shape: bf16[4,32], index: 1, kind: input, shape index: {}]
  %s2 = inlined_call_operand.vmem [shape: bf16[1,32], index: 2, kind: input, shape index: {}]
  %s3 = inlined_call_operand.vmem [shape: bf16[32,32], index: 3, kind: input, shape index: {}]
  %s4 = inlined_call_operand.vmem [shape: bf16[1,32], index: 4, kind: input, shape index: {}]
  %s5 = inlined_call_operand.vmem [shape: bf16[32,32], index: 5, kind: input, shape index: {}]
  %s6 = inlined_call_operand.vmem [shape: bf16[1,32], index: 6, kind: input, shape index: {}]
  %s7 = inlined_call_operand.vmem [shape: bf16[32,64], index: 7, kind: input, shape index: {}]
  %s8 = inlined_call_operand.vmem [shape: bf16[1,64], index: 8, kind: input, shape index: {}]
  %s9 = inlined_call_operand.vmem [shape: bf16[64,8], index: 9, kind: input, shape index: {}]
  %s10 = inlined_call_operand.vmem [shape: f32[1,8], index: 10, kind: input, shape index: {}]
  %s11 = inlined_call_operand.hbm [shape: f32[16,128], index: 11, kind: output, shape index: {}]
  %s12 = sld [smem:[#allocation0]]
  $region54: #{tpu_custom_call.1} parent=0
    _
  %s14 = ssub.s32 1, %s12
  %s15 = scalar_select 0, %s14, %s12
  $region1: #{tpu_custom_call.1} parent=0
    #allocation2 [shape = 'u8[8192]{0}', space=vmem, size = 0x2000, scoped, tag = 'output window, operand 0, single buffered']
    #allocation3 [shape = 's32[1]{0}', space=sflag, size = 0x4, scoped, tag = 'scoped memory for tpu_custom_call.1']
    %16 = vsyncpa [#allocation3], 0
    // Predicated region
    $region2: #{tpu_custom_call.1} parent=1 // pred_check
      _
    $region3: #{tpu_custom_call.1} parent=1 // pred_check_branch
      %18 = sbr.rel (0) target = $region5
    $region4: #{tpu_custom_call.1} parent=1 // pred_region
      _
    $region5: #{tpu_custom_call.1} parent=1 // pred_fallthru
      _
    // Predicated region
    $region6: #{tpu_custom_call.1} parent=1 // pred_check
      _
    $region7: #{tpu_custom_call.1} parent=1 // pred_check_branch
      %20 = sbr.rel (0) target = $region9
    $region8: #{tpu_custom_call.1} parent=1 // pred_region
      _
    $region9: #{tpu_custom_call.1} parent=1 // pred_fallthru
      _
    // Predicated region
    $region10: #{tpu_custom_call.1} parent=1 // pred_check
      _
    $region11: #{tpu_custom_call.1} parent=1 // pred_check_branch
      %22 = sbr.rel (0) target = $region13
    $region12: #{tpu_custom_call.1} parent=1 // pred_region
      _
    $region13: #{tpu_custom_call.1} parent=1 // pred_fallthru
      _
    // Predicated region
    $region14: #{tpu_custom_call.1} parent=1 // pred_check
      _
    $region15: #{tpu_custom_call.1} parent=1 // pred_check_branch
      %24 = sbr.rel (0) target = $region17
    $region16: #{tpu_custom_call.1} parent=1 // pred_region
      _
    $region17: #{tpu_custom_call.1} parent=1 // pred_fallthru
      _
    // Predicated region
    $region18: #{tpu_custom_call.1} parent=1 // pred_check
      _
    $region19: #{tpu_custom_call.1} parent=1 // pred_check_branch
      %26 = sbr.rel (0) target = $region21
    $region20: #{tpu_custom_call.1} parent=1 // pred_region
      _
    $region21: #{tpu_custom_call.1} parent=1 // pred_fallthru
      _
    // Predicated region
    $region22: #{tpu_custom_call.1} parent=1 // pred_check
      _
    $region23: #{tpu_custom_call.1} parent=1 // pred_check_branch
      %28 = sbr.rel (0) target = $region25
    $region24: #{tpu_custom_call.1} parent=1 // pred_region
      _
    $region25: #{tpu_custom_call.1} parent=1 // pred_fallthru
      _
    // Predicated region
    $region26: #{tpu_custom_call.1} parent=1 // pred_check
      _
    $region27: #{tpu_custom_call.1} parent=1 // pred_check_branch
      %30 = sbr.rel (0) target = $region29
    $region28: #{tpu_custom_call.1} parent=1 // pred_region
      _
    $region29: #{tpu_custom_call.1} parent=1 // pred_fallthru
      _
    // Predicated region
    $region30: #{tpu_custom_call.1} parent=1 // pred_check
      _
    $region31: #{tpu_custom_call.1} parent=1 // pred_check_branch
      %32 = sbr.rel (0) target = $region33
    $region32: #{tpu_custom_call.1} parent=1 // pred_region
      _
    $region33: #{tpu_custom_call.1} parent=1 // pred_fallthru
      _
    // Predicated region
    $region34: #{tpu_custom_call.1} parent=1 // pred_check
      _
    $region35: #{tpu_custom_call.1} parent=1 // pred_check_branch
      %34 = sbr.rel (0) target = $region37
    $region36: #{tpu_custom_call.1} parent=1 // pred_region
      _
    $region37: #{tpu_custom_call.1} parent=1 // pred_fallthru
      _
    // Predicated region
    $region38: #{tpu_custom_call.1} parent=1 // pred_check
      _
    $region39: #{tpu_custom_call.1} parent=1 // pred_check_branch
      %36 = sbr.rel (0) target = $region41
    $region40: #{tpu_custom_call.1} parent=1 // pred_region
      _
    $region41: #{tpu_custom_call.1} parent=1 // pred_fallthru
      _
    // Predicated region
    $region42: #{tpu_custom_call.1} parent=1 // pred_check
      _
    $region43: #{tpu_custom_call.1} parent=1 // pred_check_branch
      %38 = sbr.rel (0) target = $region45
    $region44: #{tpu_custom_call.1} parent=1 // pred_region
      _
    $region45: #{tpu_custom_call.1} parent=1 // pred_fallthru
      _
    %v40 = vld [vmem:[%s0] sm:$0xff]
    %v41 = vld [vmem:[%s0 + $0x8] sm:$0xff]
    %v42 = vpack.c.bf16 %v41, %v40
    %v43 = vld [vmem:[%s1] sm:$0x3]
    %vm44 = vcmask 31744
    %v46 = vsel %vm44, %v42, 0
    %vm48 = vcmask 1041408
    %v50 = vsel %vm48, %v43, 0
    %52 = vmatpush.bf16.msra.mxu0 0
    %53 = vmatpush.bf16.msra.mxu0 0
    %54 = vmatpush.bf16.msra.mxu0 0
    %55 = vmatpush.bf16.msra.mxu0 0
    %56 = vmatpush.bf16.msra.mxu0 0
    %57 = vmatpush.bf16.msra.mxu0 0
    %58 = vmatpush.bf16.msra.mxu0 0
    %59 = vmatpush.bf16.msra.mxu0 %v50
    %60 = vmatmul.bf16.gmra.mxu0 %v46
    %v61 = vpop.f32.mrf.mxu0
    %v62 = vadd.f32 0.0, %v61
    %v63 = vpop.f32.mrf.mxu0
    %v64 = vadd.f32 0.0, %v63
    %65 = vdwg.mxu0
    %v66 = vpack.c.bf16 %v62, %v62
    %v67 = vpack.c.bf16 %v64, %v64
    %v68 = vld [vmem:[%s2] sm:$0x1]
    %v70 = vpack.i.b16 %v68, %v68
    %v72 = vperm.slane %v70, 0
    %v73 = vunpack.c.l.bf16 %v66
    %v74 = vunpack.c.l.bf16 %v67
    %v75 = vunpack.c.l.bf16 %v72
    %v76 = vadd.f32 %v73, %v75
    %v77 = vadd.f32 %v74, %v75
    %v78 = vpack.c.bf16 %v76, %v76
    %v79 = vpack.c.bf16 %v77, %v77
    %v80 = vunpack.c.l.bf16 %v78
    %v81 = vunpack.c.l.bf16 %v79
    %v82 = vmax.f32 %v80, 0.0
    %v83 = vmax.f32 %v81, 0.0
    %v84 = vpack.c.bf16 %v83, %v82
    %v85 = vld [vmem:[%s3] sm:$0xf]
    %v86 = vld [vmem:[%s3 + $0x4] sm:$0xf]
    %v87 = vld [vmem:[%s3 + $0x8] sm:$0xf]
    %v88 = vld [vmem:[%s3 + $0xc] sm:$0xf]
    %v93 = vunpack.c.l.b16 %v85
    %v94 = vunpack.c.l.b16 %v86
    %v95 = vunpack.c.l.b16 %v87
    %v96 = vunpack.c.l.b16 %v88
    %v97 = vpack.c.b16 %v94, %v93
    %v98 = vpack.c.b16 %v96, %v95
    %vm101 = vcmask 261120
    %v103 = vsel %vm101, %v84, 0
    %105 = vmatpush.bf16.msra.mxu0 0
    %106 = vmatpush.bf16.msra.mxu0 0
    %107 = vmatpush.bf16.msra.mxu0 0
    %108 = vmatpush.bf16.msra.mxu0 0
    %109 = vmatpush.bf16.msra.mxu0 0
    %110 = vmatpush.bf16.msra.mxu0 0
    %111 = vmatpush.bf16.msra.mxu0 %v98
    %112 = vmatpush.bf16.msra.mxu0 %v97
    %113 = vmatmul.bf16.gmra.mxu0 %v103
    %v114 = vpop.f32.mrf.mxu0
    %v115 = vadd.f32 0.0, %v114
    %v116 = vpop.f32.mrf.mxu0
    %v117 = vadd.f32 0.0, %v116
    %118 = vdwg.mxu0
    %v119 = vpack.c.bf16 %v115, %v115
    %v120 = vpack.c.bf16 %v117, %v117
    %v121 = vld [vmem:[%s4] sm:$0x1]
    %v123 = vpack.i.b16 %v121, %v121
    %v125 = vperm.slane %v123, 0
    %v126 = vunpack.c.l.bf16 %v119
    %v127 = vunpack.c.l.bf16 %v120
    %v128 = vunpack.c.l.bf16 %v125
    %v129 = vadd.f32 %v126, %v128
    %v130 = vadd.f32 %v127, %v128
    %v131 = vpack.c.bf16 %v129, %v129
    %v132 = vpack.c.bf16 %v130, %v130
    %v133 = vunpack.c.l.bf16 %v131
    %v134 = vunpack.c.l.bf16 %v132
    %v135 = vmax.f32 %v133, 0.0
    %v136 = vmax.f32 %v134, 0.0
    %v137 = vpack.c.bf16 %v136, %v135
    %v138 = vld [vmem:[%s5] sm:$0xf]
    %v139 = vld [vmem:[%s5 + $0x4] sm:$0xf]
    %v140 = vld [vmem:[%s5 + $0x8] sm:$0xf]
    %v141 = vld [vmem:[%s5 + $0xc] sm:$0xf]
    %v146 = vunpack.c.l.b16 %v138
    %v147 = vunpack.c.l.b16 %v139
    %v148 = vunpack.c.l.b16 %v140
    %v149 = vunpack.c.l.b16 %v141
    %v150 = vpack.c.b16 %v147, %v146
    %v151 = vpack.c.b16 %v149, %v148
    %v155 = vsel %vm101, %v137, 0
    %157 = vmatpush.bf16.msra.mxu0 0
    %158 = vmatpush.bf16.msra.mxu0 0
    %159 = vmatpush.bf16.msra.mxu0 0
    %160 = vmatpush.bf16.msra.mxu0 0
    %161 = vmatpush.bf16.msra.mxu0 0
    %162 = vmatpush.bf16.msra.mxu0 0
    %163 = vmatpush.bf16.msra.mxu0 %v151
    %164 = vmatpush.bf16.msra.mxu0 %v150
    %165 = vmatmul.bf16.gmra.mxu0 %v155
    %v166 = vpop.f32.mrf.mxu0
    %v167 = vadd.f32 0.0, %v166
    %v168 = vpop.f32.mrf.mxu0
    %v169 = vadd.f32 0.0, %v168
    %170 = vdwg.mxu0
    %v171 = vpack.c.bf16 %v167, %v167
    %v172 = vpack.c.bf16 %v169, %v169
    %v173 = vld [vmem:[%s6] sm:$0x1]
    %v175 = vpack.i.b16 %v173, %v173
    %v177 = vperm.slane %v175, 0
    %v178 = vunpack.c.l.bf16 %v171
    %v179 = vunpack.c.l.bf16 %v172
    %v180 = vunpack.c.l.bf16 %v177
    %v181 = vadd.f32 %v178, %v180
    %v182 = vadd.f32 %v179, %v180
    %v183 = vpack.c.bf16 %v181, %v181
    %v184 = vpack.c.bf16 %v182, %v182
    %v185 = vunpack.c.l.bf16 %v183
    %v186 = vunpack.c.l.bf16 %v184
    %v187 = vmax.f32 %v185, 0.0
    %v188 = vmax.f32 %v186, 0.0
    %v189 = vpack.c.bf16 %v187, %v187
    %v190 = vpack.c.bf16 %v188, %v188
    %v191 = vld [vmem:[%s7] sm:$0xf]
    %v192 = vld [vmem:[%s7 + $0x4] sm:$0xf]
    %v193 = vld [vmem:[%s7 + $0x8] sm:$0xf]
    %v194 = vld [vmem:[%s7 + $0xc] sm:$0xf]
    %v197 = vunpack.c.l.b16 %v189
    %v198 = vunpack.c.l.b16 %v190
    %v199 = vpack.c.b16 %v198, %v197
    %v204 = vunpack.c.l.b16 %v191
    %v205 = vunpack.c.l.b16 %v192
    %v206 = vunpack.c.l.b16 %v193
    %v207 = vunpack.c.l.b16 %v194
    %v208 = vpack.c.b16 %v205, %v204
    %v209 = vpack.c.b16 %v207, %v206
    %v213 = vsel %vm101, %v199, 0
    %215 = vmatpush.bf16.msra.mxu0 0
    %216 = vmatpush.bf16.msra.mxu0 0
    %217 = vmatpush.bf16.msra.mxu0 0
    %218 = vmatpush.bf16.msra.mxu0 0
    %219 = vmatpush.bf16.msra.mxu0 0
    %220 = vmatpush.bf16.msra.mxu0 0
    %221 = vmatpush.bf16.msra.mxu0 %v209
    %222 = vmatpush.bf16.msra.mxu0 %v208
    %223 = vmatmul.bf16.gmra.mxu0 %v213
    %v224 = vpop.f32.mrf.mxu0
    %v225 = vadd.f32 0.0, %v224
    %v226 = vpop.f32.mrf.mxu0
    %v227 = vadd.f32 0.0, %v226
    %228 = vdwg.mxu0
    %v229 = vpack.c.bf16 %v225, %v225
    %v230 = vpack.c.bf16 %v227, %v227
    %v231 = vld [vmem:[%s8] sm:$0x1]
    %v233 = vpack.i.b16 %v231, %v231
    %v235 = vperm.slane %v233, 0
    %v236 = vunpack.c.l.bf16 %v229
    %v237 = vunpack.c.l.bf16 %v230
    %v238 = vunpack.c.l.bf16 %v235
    %v239 = vadd.f32 %v236, %v238
    %v240 = vadd.f32 %v237, %v238
    %v241 = vpack.c.bf16 %v239, %v239
    %v242 = vpack.c.bf16 %v240, %v240
    %v243 = vunpack.c.l.bf16 %v241
    %v244 = vunpack.c.l.bf16 %v242
    %v245 = vmax.f32 %v243, 0.0
    %v246 = vmax.f32 %v244, 0.0
    %v247 = vpack.c.bf16 %v246, %v245
    %v248 = vld [vmem:[%s9] sm:$0xf]
    %v249 = vld [vmem:[%s9 + $0x4] sm:$0xf]
    %v250 = vld [vmem:[%s9 + $0x8] sm:$0xf]
    %v251 = vld [vmem:[%s9 + $0xc] sm:$0xf]
    %v252 = vld [vmem:[%s9 + $0x10] sm:$0xf]
    %v253 = vld [vmem:[%s9 + $0x14] sm:$0xf]
    %v254 = vld [vmem:[%s9 + $0x18] sm:$0xf]
    %v255 = vld [vmem:[%s9 + $0x1c] sm:$0xf]
    %v256 = vld [vmem:[%s10] sm:$0x1]
    %v258 = vperm.slane %v256, 0
    %v268 = vunpack.c.l.b16 %v248
    %v269 = vunpack.c.l.b16 %v249
    %v270 = vunpack.c.l.b16 %v250
    %v271 = vunpack.c.l.b16 %v251
    %v272 = vunpack.c.l.b16 %v252
    %v273 = vunpack.c.l.b16 %v253
    %v274 = vunpack.c.l.b16 %v254
    %v275 = vunpack.c.l.b16 %v255
    %v276 = vpack.c.b16 %v269, %v268
    %v277 = vpack.c.b16 %v271, %v270
    %v278 = vpack.c.b16 %v273, %v272
    %v279 = vpack.c.b16 %v275, %v274
    %vm284 = vcmask 523264
    %v286 = vsel %vm284, %v247, 0
    %288 = vmatpush.bf16.msra.mxu0 0
    %289 = vmatpush.bf16.msra.mxu0 0
    %290 = vmatpush.bf16.msra.mxu0 0
    %291 = vmatpush.bf16.msra.mxu0 0
    %292 = vmatpush.bf16.msra.mxu0 %v279
    %293 = vmatpush.bf16.msra.mxu0 %v278
    %294 = vmatpush.bf16.msra.mxu0 %v277
    %295 = vmatpush.bf16.msra.mxu0 %v276
    %296 = vmatmul.bf16.gmra.mxu0 %v286
    %v297 = vpop.f32.mrf.mxu0
    %v298 = vadd.f32 %v258, %v297
    %v299 = vpop.f32.mrf.mxu0
    %v300 = vadd.f32 %v258, %v299
    %301 = vdwg.mxu0
    %v302 = vlaneseq
    %v303 = vand.u32 %v302, 127
    %vm304 = vcmp.eq.s32.totalorder %v303, 0
    %vm305 = vcmp.eq.s32.totalorder %v303, 1
    %v306 = vsel %vm305, 2.9, 0.0
    %v307 = vsel %vm304, 2.9, %v306
    %v308 = vsel %vm305, 0.1, 0.0
    %v309 = vsel %vm304, 0.1, %v308
    %v310 = vxor.u32 %v298, 2147483648
    %v311 = vxor.u32 %v300, 2147483648
    %v312 = vmul.f32 %v310, 1.442695
    %v313 = vpow.pop %v312
    %v314 = vmul.f32 %v311, 1.442695
    %v315 = vpow.pop %v314
    %v316 = vadd.f32 %v313, 1.0
    %v317 = vadd.f32 %v315, 1.0
    %v318 = vrcp.pop %v316
    %v319 = vmul.f32 %v316, %v318
    %v320 = vsub.f32 1.0, %v319
    %v321 = vmul.f32 %v318, %v320
    %v322 = vadd.f32 %v318, %v321
    %vm323 = vweird.f32 %v316
    %vm324 = vweird.f32 %v318
    %vm325 = vmor %vm323, %vm324
    %v326 = vsel %vm325, %v318, %v322
    %v327 = vand.u32 2147483647, %v316
    %vm328 = vcmp.eq.f32.partialorder %v327, 8.507059e+37
    %v329 = vand.u32 %v316, 2147483648
    %v330 = vor.u32 1.1754944e-38, %v329
    %v331 = vsel %vm328, %v330, %v326
    %v332 = vmul.f32 1.0, %v331
    %v333 = vrcp.pop %v317
    %v334 = vmul.f32 %v317, %v333
    %v335 = vsub.f32 1.0, %v334
    %v336 = vmul.f32 %v333, %v335
    %v337 = vadd.f32 %v333, %v336
    %vm338 = vweird.f32 %v317
    %vm339 = vweird.f32 %v333
    %vm340 = vmor %vm338, %vm339
    %v341 = vsel %vm340, %v333, %v337
    %v342 = vand.u32 2147483647, %v317
    %vm343 = vcmp.eq.f32.partialorder %v342, 8.507059e+37
    %v344 = vand.u32 %v317, 2147483648
    %v345 = vor.u32 1.1754944e-38, %v344
    %v346 = vsel %vm343, %v345, %v341
    %v347 = vmul.f32 1.0, %v346
    %v348 = vmul.f32 %v332, %v307
    %v349 = vmul.f32 %v347, %v307
    %v350 = vadd.f32 %v348, %v309
    %v351 = vadd.f32 %v349, %v309
    %vm352 = vcmp.ge.s32.totalorder %v303, 2
    %vm353 = vcmp.le.s32.totalorder %v303, 5
    %vm354 = vmand %vm352, %vm353
    %vm355 = vcmp.ge.s32.totalorder %v303, 6
    %v356 = vsel %vm354, %v298, -inf
    %v357 = vsel %vm354, %v300, -inf
    %vm358 = vcmask 64512
    %v359 = vsel %vm358, %v356, -inf
    %360 = vmax.xlane.f32.xlu0 %v359
    %v361 = vpop.xlane.xlu0 %360
    %v362 = vsel %vm358, %v357, -inf
    %363 = vmax.xlane.f32.xlu0 %v362
    %v364 = vpop.xlane.xlu0 %363
    %v365 = vsub.f32 %v356, %v361
    %v366 = vsub.f32 %v357, %v364
    %v367 = vmul.f32 %v365, 1.442695
    %v368 = vpow.pop %v367
    %v369 = vmul.f32 %v366, 1.442695
    %v370 = vpow.pop %v369
    %v371 = vsel %vm358, %v368, 0.0
    %372 = vadd.xlane.f32.xlu0 %v371
    %v373 = vpop.xlane.xlu0 %372
    %v374 = vsel %vm358, %v370, 0.0
    %375 = vadd.xlane.f32.xlu0 %v374
    %v376 = vpop.xlane.xlu0 %375
    %v377 = vrcp.pop %v373
    %v378 = vrcp.pop %v376
    %v379 = vmul.f32 %v368, %v377
    %v380 = vmul.f32 %v370, %v378
    %v381 = vsel %vm355, %v298, -inf
    %v382 = vsel %vm355, %v300, -inf
    %v383 = vsel %vm358, %v381, -inf
    %384 = vmax.xlane.f32.xlu0 %v383
    %v385 = vpop.xlane.xlu0 %384
    %v386 = vsel %vm358, %v382, -inf
    %387 = vmax.xlane.f32.xlu0 %v386
    %v388 = vpop.xlane.xlu0 %387
    %v389 = vsub.f32 %v381, %v385
    %v390 = vsub.f32 %v382, %v388
    %v391 = vmul.f32 %v389, 1.442695
    %v392 = vpow.pop %v391
    %v393 = vmul.f32 %v390, 1.442695
    %v394 = vpow.pop %v393
    %v395 = vsel %vm358, %v392, 0.0
    %396 = vadd.xlane.f32.xlu0 %v395
    %v397 = vpop.xlane.xlu0 %396
    %v398 = vsel %vm358, %v394, 0.0
    %399 = vadd.xlane.f32.xlu0 %v398
    %v400 = vpop.xlane.xlu0 %399
    %v401 = vrcp.pop %v397
    %v402 = vrcp.pop %v400
    %v403 = vmul.f32 %v392, %v401
    %v404 = vmul.f32 %v394, %v402
    %vm405 = vcmp.lt.s32.totalorder %v303, 2
    %v406 = vsel %vm354, %v379, %v403
    %v407 = vsel %vm354, %v380, %v404
    %v408 = vsel %vm405, %v350, %v406
    %v409 = vsel %vm405, %v351, %v407
    %v410 = vunpack.c.l.bf16 %v189
    %v411 = vunpack.c.l.bf16 %v190
    %414 = vrot.lane.b32.xlu0 %v408, 32
    %v415 = vpop.permute.xlu0 %414
    %416 = vrot.lane.b32.xlu0 %v409, 32
    %v417 = vpop.permute.xlu0 %416
    %v420 = vsel %vm101, %v410, %v415
    %v421 = vsel %vm101, %v411, %v417
    %vm422 = vcmask 326656
    %v423 = vsel %vm422, %v420, 0.0
    %v424 = vsel %vm422, %v421, 0.0
    %425 = vst [vmem:[#allocation2] sm:$0xff] %v423
    %426 = vst [vmem:[#allocation2 + $0x8] sm:$0xff] %v424
    // Predicated region
    $region46: #{tpu_custom_call.1} parent=1 // pred_check
      _
    $region47: #{tpu_custom_call.1} parent=1 // pred_check_branch
      %428 = sbr.rel (0) target = $region49
    $region48: #{tpu_custom_call.1} parent=1 // pred_region
      %430 = vsyncadd [#allocation3], 0
      %s431 = sshll.u32 [#allocation2], 4
      %s432 = int_to_ptr.vmem [resolvable:$true] %s431
      %s433 = sshll.u32 %s11, 4
      %s434 = int_to_ptr.hbm [resolvable:$true] %s433
      %439 = dma.vmem_to_hbm [thread:$0]  %s432, 256, %s434, [#allocation3], 128, 128, 8
    $region49: #{tpu_custom_call.1} parent=1 // pred_fallthru
      _
    // Predicated region
    $region50: #{tpu_custom_call.1} parent=1 // pred_check
      _
    $region51: #{tpu_custom_call.1} parent=1 // pred_check_branch
      %441 = sbr.rel (0) target = $region53
    $region52: #{tpu_custom_call.1} parent=1 // pred_region
      %443 = dma.done [#allocation3], 256
    $region53: #{tpu_custom_call.1} parent=1 // pred_fallthru
      _
    %444 = vsyncpa [#allocation3], 1

</llo_original>
